<compile_context>
chip_gen: v5e
topology: v5e:2x2
jax: 0.10.0
libtpu: 0.0.40
codegen_flags: <defaults>
</compile_context>

<pallas_src>
import jax
import jax.numpy as jnp
from jax.experimental import pallas as pl
from jax.experimental.pallas import tpu as pltpu

# Below this many elements, kernel launch overhead dwarfs the compute;
# plain XLA handles it (and fuses it into neighbours) for free.
_SMALL_INPUT_ELEMS = 1 << 14  # 16K elements

# Target VMEM block size. With identity in/out specs Pallas double-buffers
# both input and output (4 buffers), so 2 MiB blocks -> ~8 MiB VMEM: safe on
# v5e/v6e/v7x default scoped limits without touching vmem_limit_bytes.
_TARGET_BLOCK_BYTES = 2 * 1024 * 1024

# Candidate lane-dense widths (wide multiples of 128), widest first.
_LANE_WIDTHS = (8192, 4096, 2048, 1024, 512, 256, 128)


def _attr_relu_kernel(x_ref, o_ref):
    # Elementwise clamp(min=0) on the current VMEM tile: one vmax per vreg,
    # dtype-matched zero so no accidental up/down casts for bf16/int inputs.
    x = x_ref[...]
    o_ref[...] = jnp.maximum(x, jnp.zeros((), dtype=x.dtype))


def attr_relu_forward(x, base_input=0.0, base_output=0.0):
    """Forward of AttrReLUModule: ReLU(x). base_* only matter for backward."""
    # TODO(synk): base_input / base_output are only used in the custom backward rule.
    del base_input, base_output

    dtype = x.dtype
    shape = x.shape
    total = x.size
    zero = jnp.zeros((), dtype=dtype)

    # Small-input fast path: skip pallas_call entirely.
    if total < _SMALL_INPUT_ELEMS:
        return jnp.maximum(x, zero)

    itemsize = jnp.dtype(dtype).itemsize
    x_flat = x.reshape(-1)

    # Lane-dense layout: pick the widest last dim that divides the element
    # count cleanly (long DMA bursts, unmasked wide vst). Fallback 128.
    lane_w = 128
    for cand in _LANE_WIDTHS:
        if total % cand == 0 and total // cand >= 8:
            lane_w = cand
            break
    rows_all = total // lane_w  # >= 8 given total >= _SMALL_INPUT_ELEMS

    # ~2 MiB blocks; tile_rows a multiple of 32 for full sublane packing.
    tile_rows = max(32, _TARGET_BLOCK_BYTES // (lane_w * itemsize))
    tile_rows -= tile_rows % 32
    if tile_rows >= rows_all:
        # Single block covering (almost) the whole slab; keep rows (8,128)-aligned.
        grid_rows = (rows_all // 8) * 8
        tile_rows = grid_rows
    else:
        grid_rows = (rows_all // tile_rows) * tile_rows

    main_elems = grid_rows * lane_w
    tail_elems = total - main_elems  # ragged tail (< one block), done outside

    x_main = (x_flat if tail_elems == 0 else x_flat[:main_elems]).reshape(
        grid_rows, lane_w)

    out_main = pl.pallas_call(
        _attr_relu_kernel,
        out_shape=jax.ShapeDtypeStruct((grid_rows, lane_w), dtype),
        grid_spec=pltpu.PrefetchScalarGridSpec(
            num_scalar_prefetch=0,
            grid=(grid_rows // tile_rows,),
            in_specs=[pl.BlockSpec((tile_rows, lane_w), lambda i: (i, 0))],
            out_specs=pl.BlockSpec((tile_rows, lane_w), lambda i: (i, 0)),
        ),
        compiler_params=pltpu.CompilerParams(
            # Shards the grid across both TensorCores on v7x; no-op on v5e/v6e.
            dimension_semantics=("parallel",),
        ),
        # Elementwise, shape/dtype-preserving: donate the input buffer.
        input_output_aliases={0: 0},
    )(x_main)

    if tail_elems:
        tail = jnp.maximum(x_flat[main_elems:], zero)
        out_flat = jnp.concatenate([out_main.reshape(-1), tail])
    else:
        out_flat = out_main.reshape(-1)
    return out_flat.reshape(shape)


if __name__ == "__main__":
    key = jax.random.PRNGKey(0)
    k1, k2, k3 = jax.random.split(key, 3)

    # 1) Module-consistent small NCHW input (B=2, C=4, H=16, W=16):
    #    takes the small-input fast path.
    x_small = jax.random.normal(k1, (2, 4, 16, 16), dtype=jnp.float32)
    y_small = jax.block_until_ready(attr_relu_forward(x_small, 0.0, 0.0))
    assert y_small.shape == x_small.shape and y_small.dtype == x_small.dtype
    assert jnp.allclose(y_small, jnp.maximum(x_small, 0.0))

    # 2) Larger NCHW input that exercises the lane-dense Pallas kernel path.
    x_big = jax.random.normal(k2, (2, 8, 64, 128), dtype=jnp.float32)
    y_big = jax.block_until_ready(attr_relu_forward(x_big, 0.0, 0.0))
    assert y_big.shape == x_big.shape and y_big.dtype == x_big.dtype
    assert jnp.allclose(y_big, jnp.maximum(x_big, 0.0))

    # 3) Ragged shape (element count not a multiple of 128): kernel covers the
    #    aligned main region, plain jnp.maximum handles the small tail.
    x_ragged = jax.random.normal(k3, (2, 4, 51, 51), dtype=jnp.float32)
    y_ragged = jax.block_until_ready(attr_relu_forward(x_ragged, 0.0, 0.0))
    assert y_ragged.shape == x_ragged.shape and y_ragged.dtype == x_ragged.dtype
    assert jnp.allclose(y_ragged, jnp.maximum(x_ragged, 0.0))

    print("KERNEL_OK")
</pallas_src>

<mosaic_0001>
module attributes {stable_mosaic.version = 11 : i64} {
  func.func @_attr_relu_kernel(%arg0: i32, %arg1: memref<16x8192xf32, #tpu.memory_space<vmem>>, %arg2: memref<16x8192xf32, #tpu.memory_space<vmem>>) attributes {dimension_semantics = [#tpu.dimension_semantics<parallel>], iteration_bounds = array<i64: 1>, scalar_prefetch = 0 : i64, scratch_operands = 0 : i64, tpu.core_type = #tpu.core_type<tc>, window_params = [{transform_indices = @transform_0, window_bounds = array<i64: 16, 8192>}, {transform_indices = @transform_1, window_bounds = array<i64: 16, 8192>}]} {
    %c0 = arith.constant 0 : index
    %c0_0 = arith.constant 0 : index
    %0 = vector.load %arg1[%c0, %c0_0] : memref<16x8192xf32, #tpu.memory_space<vmem>>, vector<16x8192xf32>
    %cst = arith.constant 0.000000e+00 : f32
    %1 = vector.broadcast %cst : f32 to vector<16x8192xf32>
    %2 = arith.maximumf %0, %1 : vector<16x8192xf32>
    %c0_1 = arith.constant 0 : index
    %c0_2 = arith.constant 0 : index
    %3 = vector.load %arg2[%c0_1, %c0_2] : memref<16x8192xf32, #tpu.memory_space<vmem>>, vector<16x8192xf32>
    tpu.vector_store %arg2[%c0_1, %c0_2], %2 {strides = array<i32>} : memref<16x8192xf32, #tpu.memory_space<vmem>>, vector<16x8192xf32>,
    return
  }
  func.func @transform_0(%arg0: i32) -> (i32, i32) {
    %c0_i32 = arith.constant 0 : i32
    %c0_i32_0 = arith.constant 0 : i32
    return %arg0, %c0_i32 : i32, i32
  }
  func.func @transform_1(%arg0: i32) -> (i32, i32) {
    %c0_i32 = arith.constant 0 : i32
    %c0_i32_0 = arith.constant 0 : i32
    return %arg0, %c0_i32 : i32, i32
  }
}

</mosaic_0001>

<llo_original>
// kernel: tpu_custom_call.1
$region0: #{tpu_custom_call.1}
  #allocation0 [shape = 'u32[]', space=smem, size = 0x4, offset = 0x4, fixed_abs, tag = 'smem constant byte address 0x4 - core index']
  #allocation1 [shape = 'u32[72,128]{1,0:T(1,128)}', space=vmem, size = 0x9000, scoped, tag = 'internal scratch']
  %s0 = inlined_call_operand.hbm [shape: f32[16,8192], index: 0, kind: input, shape index: {}, may-alias: {0,1}]
  %s1 = inlined_call_operand.hbm [shape: f32[16,8192], index: 1, kind: output, shape index: {}, may-alias: {0,1}]
  %s2 = sld [smem:[#allocation0]]
  $region18: #{tpu_custom_call.1} parent=0
    _
  %s4 = ssub.s32 1, %s2
  %s5 = scalar_select 0, %s4, %s2
  $region1: #{tpu_custom_call.1} parent=0
    #allocation2 [shape = 'u8[524288]{0}', space=vmem, size = 0x80000, scoped, tag = 'input window, operand 0, single buffered']
    #allocation3 [shape = 's32[1]{0}', space=sflag, size = 0x4, scoped, tag = 'scoped memory for tpu_custom_call.1']
    #allocation4 [shape = 's32[1]{0}', space=sflag, size = 0x4, scoped, tag = 'scoped memory for tpu_custom_call.1']
    #allocation5 [shape = 'u8[524288]{0}', space=vmem, size = 0x80000, scoped, tag = 'output window, operand 0, single buffered']
    %6 = vsyncpa [#allocation3], 0
    %7 = vsyncpa [#allocation4], 0
    // Predicated region
    $region2: #{tpu_custom_call.1} parent=1 // pred_check
      _
    $region3: #{tpu_custom_call.1} parent=1 // pred_check_branch
      %9 = sbr.rel (0) target = $region5
    $region4: #{tpu_custom_call.1} parent=1 // pred_region
      %11 = vsyncadd [#allocation3], 0
      %s12 = sshll.u32 %s0, 4
      %s13 = int_to_ptr.hbm [resolvable:$true] %s12
      %s14 = sshll.u32 [#allocation2], 4
      %s15 = int_to_ptr.vmem [resolvable:$true] %s14
      %20 = dma.hbm_to_vmem [thread:$0]  %s13, 16384, %s15, [#allocation3], 8192, 8192, 512
    $region5: #{tpu_custom_call.1} parent=1 // pred_fallthru
      _
    // Predicated region
    $region6: #{tpu_custom_call.1} parent=1 // pred_check
      _
    $region7: #{tpu_custom_call.1} parent=1 // pred_check_branch
      %22 = sbr.rel (0) target = $region9
    $region8: #{tpu_custom_call.1} parent=1 // pred_region
      %24 = dma.done [#allocation3], 16384
    $region9: #{tpu_custom_call.1} parent=1 // pred_fallthru
      _
    %v25 = vld [vmem:[#allocation2] sm:$0xff]
    %v26 = vld [vmem:[#allocation2 + $0x8] sm:$0xff]
    %v27 = vld [vmem:[#allocation2 + $0x10] sm:$0xff]
    %v28 = vld [vmem:[#allocation2 + $0x18] sm:$0xff]
    %v29 = vld [vmem:[#allocation2 + $0x20] sm:$0xff]
    %v30 = vld [vmem:[#allocation2 + $0x28] sm:$0xff]
    %v31 = vld [vmem:[#allocation2 + $0x30] sm:$0xff]
    %v32 = vld [vmem:[#allocation2 + $0x38] sm:$0xff]
    %v33 = vld [vmem:[#allocation2 + $0x40] sm:$0xff]
    %v34 = vld [vmem:[#allocation2 + $0x48] sm:$0xff]
    %v35 = vld [vmem:[#allocation2 + $0x50] sm:$0xff]
    %v36 = vld [vmem:[#allocation2 + $0x58] sm:$0xff]
    %v37 = vld [vmem:[#allocation2 + $0x60] sm:$0xff]
    %v38 = vld [vmem:[#allocation2 + $0x68] sm:$0xff]
    %v39 = vld [vmem:[#allocation2 + $0x70] sm:$0xff]
    %v40 = vld [vmem:[#allocation2 + $0x78] sm:$0xff]
    %v41 = vld [vmem:[#allocation2 + $0x80] sm:$0xff]
    %v42 = vld [vmem:[#allocation2 + $0x88] sm:$0xff]
    %v43 = vld [vmem:[#allocation2 + $0x90] sm:$0xff]
    %v44 = vld [vmem:[#allocation2 + $0x98] sm:$0xff]
    %v45 = vld [vmem:[#allocation2 + $0xa0] sm:$0xff]
    %v46 = vld [vmem:[#allocation2 + $0xa8] sm:$0xff]
    %v47 = vld [vmem:[#allocation2 + $0xb0] sm:$0xff]
    %v48 = vld [vmem:[#allocation2 + $0xb8] sm:$0xff]
    %v49 = vld [vmem:[#allocation2 + $0xc0] sm:$0xff]
    %v50 = vld [vmem:[#allocation2 + $0xc8] sm:$0xff]
    %v51 = vld [vmem:[#allocation2 + $0xd0] sm:$0xff]
    %v52 = vld [vmem:[#allocation2 + $0xd8] sm:$0xff]
    %v53 = vld [vmem:[#allocation2 + $0xe0] sm:$0xff]
    %v54 = vld [vmem:[#allocation2 + $0xe8] sm:$0xff]
    %v55 = vld [vmem:[#allocation2 + $0xf0] sm:$0xff]
    %v56 = vld [vmem:[#allocation2 + $0xf8] sm:$0xff]
    %v57 = vld [vmem:[#allocation2 + $0x100] sm:$0xff]
    %v58 = vld [vmem:[#allocation2 + $0x108] sm:$0xff]
    %v59 = vld [vmem:[#allocation2 + $0x110] sm:$0xff]
    %v60 = vld [vmem:[#allocation2 + $0x118] sm:$0xff]
    %v61 = vld [vmem:[#allocation2 + $0x120] sm:$0xff]
    %v62 = vld [vmem:[#allocation2 + $0x128] sm:$0xff]
    %v63 = vld [vmem:[#allocation2 + $0x130] sm:$0xff]
    %v64 = vld [vmem:[#allocation2 + $0x138] sm:$0xff]
    %v65 = vld [vmem:[#allocation2 + $0x140] sm:$0xff]
    %v66 = vld [vmem:[#allocation2 + $0x148] sm:$0xff]
    %v67 = vld [vmem:[#allocation2 + $0x150] sm:$0xff]
    %v68 = vld [vmem:[#allocation2 + $0x158] sm:$0xff]
    %v69 = vld [vmem:[#allocation2 + $0x160] sm:$0xff]
    %v70 = vld [vmem:[#allocation2 + $0x168] sm:$0xff]
    %v71 = vld [vmem:[#allocation2 + $0x170] sm:$0xff]
    %v72 = vld [vmem:[#allocation2 + $0x178] sm:$0xff]
    %v73 = vld [vmem:[#allocation2 + $0x180] sm:$0xff]
    %v74 = vld [vmem:[#allocation2 + $0x188] sm:$0xff]
    %v75 = vld [vmem:[#allocation2 + $0x190] sm:$0xff]
    %v76 = vld [vmem:[#allocation2 + $0x198] sm:$0xff]
    %v77 = vld [vmem:[#allocation2 + $0x1a0] sm:$0xff]
    %v78 = vld [vmem:[#allocation2 + $0x1a8] sm:$0xff]
    %v79 = vld [vmem:[#allocation2 + $0x1b0] sm:$0xff]
    %v80 = vld [vmem:[#allocation2 + $0x1b8] sm:$0xff]
    %v81 = vld [vmem:[#allocation2 + $0x1c0] sm:$0xff]
    %v82 = vld [vmem:[#allocation2 + $0x1c8] sm:$0xff]
    %v83 = vld [vmem:[#allocation2 + $0x1d0] sm:$0xff]
    %v84 = vld [vmem:[#allocation2 + $0x1d8] sm:$0xff]
    %v85 = vld [vmem:[#allocation2 + $0x1e0] sm:$0xff]
    %v86 = vld [vmem:[#allocation2 + $0x1e8] sm:$0xff]
    %v87 = vld [vmem:[#allocation2 + $0x1f0] sm:$0xff]
    %v88 = vld [vmem:[#allocation2 + $0x1f8] sm:$0xff]
    %v89 = vld [vmem:[#allocation2 + $0x200] sm:$0xff]
    %v90 = vld [vmem:[#allocation2 + $0x208] sm:$0xff]
    %v91 = vld [vmem:[#allocation2 + $0x210] sm:$0xff]
    %v92 = vld [vmem:[#allocation2 + $0x218] sm:$0xff]
    %v93 = vld [vmem:[#allocation2 + $0x220] sm:$0xff]
    %v94 = vld [vmem:[#allocation2 + $0x228] sm:$0xff]
    %v95 = vld [vmem:[#allocation2 + $0x230] sm:$0xff]
    %v96 = vld [vmem:[#allocation2 + $0x238] sm:$0xff]
    %v97 = vld [vmem:[#allocation2 + $0x240] sm:$0xff]
    %v98 = vld [vmem:[#allocation2 + $0x248] sm:$0xff]
    %v99 = vld [vmem:[#allocation2 + $0x250] sm:$0xff]
    %v100 = vld [vmem:[#allocation2 + $0x258] sm:$0xff]
    %v101 = vld [vmem:[#allocation2 + $0x260] sm:$0xff]
    %v102 = vld [vmem:[#allocation2 + $0x268] sm:$0xff]
    %v103 = vld [vmem:[#allocation2 + $0x270] sm:$0xff]
    %v104 = vld [vmem:[#allocation2 + $0x278] sm:$0xff]
    %v105 = vld [vmem:[#allocation2 + $0x280] sm:$0xff]
    %v106 = vld [vmem:[#allocation2 + $0x288] sm:$0xff]
    %v107 = vld [vmem:[#allocation2 + $0x290] sm:$0xff]
    %v108 = vld [vmem:[#allocation2 + $0x298] sm:$0xff]
    %v109 = vld [vmem:[#allocation2 + $0x2a0] sm:$0xff]
    %v110 = vld [vmem:[#allocation2 + $0x2a8] sm:$0xff]
    %v111 = vld [vmem:[#allocation2 + $0x2b0] sm:$0xff]
    %v112 = vld [vmem:[#allocation2 + $0x2b8] sm:$0xff]
    %v113 = vld [vmem:[#allocation2 + $0x2c0] sm:$0xff]
    %v114 = vld [vmem:[#allocation2 + $0x2c8] sm:$0xff]
    %v115 = vld [vmem:[#allocation2 + $0x2d0] sm:$0xff]
    %v116 = vld [vmem:[#allocation2 + $0x2d8] sm:$0xff]
    %v117 = vld [vmem:[#allocation2 + $0x2e0] sm:$0xff]
    %v118 = vld [vmem:[#allocation2 + $0x2e8] sm:$0xff]
    %v119 = vld [vmem:[#allocation2 + $0x2f0] sm:$0xff]
    %v120 = vld [vmem:[#allocation2 + $0x2f8] sm:$0xff]
    %v121 = vld [vmem:[#allocation2 + $0x300] sm:$0xff]
    %v122 = vld [vmem:[#allocation2 + $0x308] sm:$0xff]
    %v123 = vld [vmem:[#allocation2 + $0x310] sm:$0xff]
    %v124 = vld [vmem:[#allocation2 + $0x318] sm:$0xff]
    %v125 = vld [vmem:[#allocation2 + $0x320] sm:$0xff]
    %v126 = vld [vmem:[#allocation2 + $0x328] sm:$0xff]
    %v127 = vld [vmem:[#allocation2 + $0x330] sm:$0xff]
    %v128 = vld [vmem:[#allocation2 + $0x338] sm:$0xff]
    %v129 = vld [vmem:[#allocation2 + $0x340] sm:$0xff]
    %v130 = vld [vmem:[#allocation2 + $0x348] sm:$0xff]
    %v131 = vld [vmem:[#allocation2 + $0x350] sm:$0xff]
    %v132 = vld [vmem:[#allocation2 + $0x358] sm:$0xff]
    %v133 = vld [vmem:[#allocation2 + $0x360] sm:$0xff]
    %v134 = vld [vmem:[#allocation2 + $0x368] sm:$0xff]
    %v135 = vld [vmem:[#allocation2 + $0x370] sm:$0xff]
    %v136 = vld [vmem:[#allocation2 + $0x378] sm:$0xff]
    %v137 = vld [vmem:[#allocation2 + $0x380] sm:$0xff]
    %v138 = vld [vmem:[#allocation2 + $0x388] sm:$0xff]
    %v139 = vld [vmem:[#allocation2 + $0x390] sm:$0xff]
    %v140 = vld [vmem:[#allocation2 + $0x398] sm:$0xff]
    %v141 = vld [vmem:[#allocation2 + $0x3a0] sm:$0xff]
    %v142 = vld [vmem:[#allocation2 + $0x3a8] sm:$0xff]
    %v143 = vld [vmem:[#allocation2 + $0x3b0] sm:$0xff]
    %v144 = vld [vmem:[#allocation2 + $0x3b8] sm:$0xff]
    %v145 = vld [vmem:[#allocation2 + $0x3c0] sm:$0xff]
    %v146 = vld [vmem:[#allocation2 + $0x3c8] sm:$0xff]
    %v147 = vld [vmem:[#allocation2 + $0x3d0] sm:$0xff]
    %v148 = vld [vmem:[#allocation2 + $0x3d8] sm:$0xff]
    %v149 = vld [vmem:[#allocation2 + $0x3e0] sm:$0xff]
    %v150 = vld [vmem:[#allocation2 + $0x3e8] sm:$0xff]
    %v151 = vld [vmem:[#allocation2 + $0x3f0] sm:$0xff]
    %v152 = vld [vmem:[#allocation2 + $0x3f8] sm:$0xff]
    %v153 = vmax.f32 %v25, 0.0
    %v154 = vmax.f32 %v26, 0.0
    %v155 = vmax.f32 %v27, 0.0
    %v156 = vmax.f32 %v28, 0.0
    %v157 = vmax.f32 %v29, 0.0
    %v158 = vmax.f32 %v30, 0.0
    %v159 = vmax.f32 %v31, 0.0
    %v160 = vmax.f32 %v32, 0.0
    %v161 = vmax.f32 %v33, 0.0
    %v162 = vmax.f32 %v34, 0.0
    %v163 = vmax.f32 %v35, 0.0
    %v164 = vmax.f32 %v36, 0.0
    %v165 = vmax.f32 %v37, 0.0
    %v166 = vmax.f32 %v38, 0.0
    %v167 = vmax.f32 %v39, 0.0
    %v168 = vmax.f32 %v40, 0.0
    %v169 = vmax.f32 %v41, 0.0
    %v170 = vmax.f32 %v42, 0.0
    %v171 = vmax.f32 %v43, 0.0
    %v172 = vmax.f32 %v44, 0.0
    %v173 = vmax.f32 %v45, 0.0
    %v174 = vmax.f32 %v46, 0.0
    %v175 = vmax.f32 %v47, 0.0
    %v176 = vmax.f32 %v48, 0.0
    %v177 = vmax.f32 %v49, 0.0
    %v178 = vmax.f32 %v50, 0.0
    %v179 = vmax.f32 %v51, 0.0
    %v180 = vmax.f32 %v52, 0.0
    %v181 = vmax.f32 %v53, 0.0
    %v182 = vmax.f32 %v54, 0.0
    %v183 = vmax.f32 %v55, 0.0
    %v184 = vmax.f32 %v56, 0.0
    %v185 = vmax.f32 %v57, 0.0
    %v186 = vmax.f32 %v58, 0.0
    %v187 = vmax.f32 %v59, 0.0
    %v188 = vmax.f32 %v60, 0.0
    %v189 = vmax.f32 %v61, 0.0
    %v190 = vmax.f32 %v62, 0.0
    %v191 = vmax.f32 %v63, 0.0
    %v192 = vmax.f32 %v64, 0.0
    %v193 = vmax.f32 %v65, 0.0
    %v194 = vmax.f32 %v66, 0.0
    %v195 = vmax.f32 %v67, 0.0
    %v196 = vmax.f32 %v68, 0.0
    %v197 = vmax.f32 %v69, 0.0
    %v198 = vmax.f32 %v70, 0.0
    %v199 = vmax.f32 %v71, 0.0
    %v200 = vmax.f32 %v72, 0.0
    %v201 = vmax.f32 %v73, 0.0
    %v202 = vmax.f32 %v74, 0.0
    %v203 = vmax.f32 %v75, 0.0
    %v204 = vmax.f32 %v76, 0.0
    %v205 = vmax.f32 %v77, 0.0
    %v206 = vmax.f32 %v78, 0.0
    %v207 = vmax.f32 %v79, 0.0
    %v208 = vmax.f32 %v80, 0.0
    %v209 = vmax.f32 %v81, 0.0
    %v210 = vmax.f32 %v82, 0.0
    %v211 = vmax.f32 %v83, 0.0
    %v212 = vmax.f32 %v84, 0.0
    %v213 = vmax.f32 %v85, 0.0
    %v214 = vmax.f32 %v86, 0.0
    %v215 = vmax.f32 %v87, 0.0
    %v216 = vmax.f32 %v88, 0.0
    %v217 = vmax.f32 %v89, 0.0
    %v218 = vmax.f32 %v90, 0.0
    %v219 = vmax.f32 %v91, 0.0
    %v220 = vmax.f32 %v92, 0.0
    %v221 = vmax.f32 %v93, 0.0
    %v222 = vmax.f32 %v94, 0.0
    %v223 = vmax.f32 %v95, 0.0
    %v224 = vmax.f32 %v96, 0.0
    %v225 = vmax.f32 %v97, 0.0
    %v226 = vmax.f32 %v98, 0.0
    %v227 = vmax.f32 %v99, 0.0
    %v228 = vmax.f32 %v100, 0.0
    %v229 = vmax.f32 %v101, 0.0
    %v230 = vmax.f32 %v102, 0.0
    %v231 = vmax.f32 %v103, 0.0
    %v232 = vmax.f32 %v104, 0.0
    %v233 = vmax.f32 %v105, 0.0
    %v234 = vmax.f32 %v106, 0.0
    %v235 = vmax.f32 %v107, 0.0
    %v236 = vmax.f32 %v108, 0.0
    %v237 = vmax.f32 %v109, 0.0
    %v238 = vmax.f32 %v110, 0.0
    %v239 = vmax.f32 %v111, 0.0
    %v240 = vmax.f32 %v112, 0.0
    %v241 = vmax.f32 %v113, 0.0
    %v242 = vmax.f32 %v114, 0.0
    %v243 = vmax.f32 %v115, 0.0
    %v244 = vmax.f32 %v116, 0.0
    %v245 = vmax.f32 %v117, 0.0
    %v246 = vmax.f32 %v118, 0.0
    %v247 = vmax.f32 %v119, 0.0
    %v248 = vmax.f32 %v120, 0.0
    %v249 = vmax.f32 %v121, 0.0
    %v250 = vmax.f32 %v122, 0.0
    %v251 = vmax.f32 %v123, 0.0
    %v252 = vmax.f32 %v124, 0.0
    %v253 = vmax.f32 %v125, 0.0
    %v254 = vmax.f32 %v126, 0.0
    %v255 = vmax.f32 %v127, 0.0
    %v256 = vmax.f32 %v128, 0.0
    %v257 = vmax.f32 %v129, 0.0
    %v258 = vmax.f32 %v130, 0.0
    %v259 = vmax.f32 %v131, 0.0
    %v260 = vmax.f32 %v132, 0.0
    %v261 = vmax.f32 %v133, 0.0
    %v262 = vmax.f32 %v134, 0.0
    %v263 = vmax.f32 %v135, 0.0
    %v264 = vmax.f32 %v136, 0.0
    %v265 = vmax.f32 %v137, 0.0
    %v266 = vmax.f32 %v138, 0.0
    %v267 = vmax.f32 %v139, 0.0
    %v268 = vmax.f32 %v140, 0.0
    %v269 = vmax.f32 %v141, 0.0
    %v270 = vmax.f32 %v142, 0.0
    %v271 = vmax.f32 %v143, 0.0
    %v272 = vmax.f32 %v144, 0.0
    %v273 = vmax.f32 %v145, 0.0
    %v274 = vmax.f32 %v146, 0.0
    %v275 = vmax.f32 %v147, 0.0
    %v276 = vmax.f32 %v148, 0.0
    %v277 = vmax.f32 %v149, 0.0
    %v278 = vmax.f32 %v150, 0.0
    %v279 = vmax.f32 %v151, 0.0
    %v280 = vmax.f32 %v152, 0.0
    %281 = vst [vmem:[#allocation5] sm:$0xff] %v153
    %282 = vst [vmem:[#allocation5 + $0x8] sm:$0xff] %v154
    %283 = vst [vmem:[#allocation5 + $0x10] sm:$0xff] %v155
    %284 = vst [vmem:[#allocation5 + $0x18] sm:$0xff] %v156
    %285 = vst [vmem:[#allocation5 + $0x20] sm:$0xff] %v157
    %286 = vst [vmem:[#allocation5 + $0x28] sm:$0xff] %v158
    %287 = vst [vmem:[#allocation5 + $0x30] sm:$0xff] %v159
    %288 = vst [vmem:[#allocation5 + $0x38] sm:$0xff] %v160
    %289 = vst [vmem:[#allocation5 + $0x40] sm:$0xff] %v161
    %290 = vst [vmem:[#allocation5 + $0x48] sm:$0xff] %v162
    %291 = vst [vmem:[#allocation5 + $0x50] sm:$0xff] %v163
    %292 = vst [vmem:[#allocation5 + $0x58] sm:$0xff] %v164
    %293 = vst [vmem:[#allocation5 + $0x60] sm:$0xff] %v165
    %294 = vst [vmem:[#allocation5 + $0x68] sm:$0xff] %v166
    %295 = vst [vmem:[#allocation5 + $0x70] sm:$0xff] %v167
    %296 = vst [vmem:[#allocation5 + $0x78] sm:$0xff] %v168
    %297 = vst [vmem:[#allocation5 + $0x80] sm:$0xff] %v169
    %298 = vst [vmem:[#allocation5 + $0x88] sm:$0xff] %v170
    %299 = vst [vmem:[#allocation5 + $0x90] sm:$0xff] %v171
    %300 = vst [vmem:[#allocation5 + $0x98] sm:$0xff] %v172
    %301 = vst [vmem:[#allocation5 + $0xa0] sm:$0xff] %v173
    %302 = vst [vmem:[#allocation5 + $0xa8] sm:$0xff] %v174
    %303 = vst [vmem:[#allocation5 + $0xb0] sm:$0xff] %v175
    %304 = vst [vmem:[#allocation5 + $0xb8] sm:$0xff] %v176
    %305 = vst [vmem:[#allocation5 + $0xc0] sm:$0xff] %v177
    %306 = vst [vmem:[#allocation5 + $0xc8] sm:$0xff] %v178
    %307 = vst [vmem:[#allocation5 + $0xd0] sm:$0xff] %v179
    %308 = vst [vmem:[#allocation5 + $0xd8] sm:$0xff] %v180
    %309 = vst [vmem:[#allocation5 + $0xe0] sm:$0xff] %v181
    %310 = vst [vmem:[#allocation5 + $0xe8] sm:$0xff] %v182
    %311 = vst [vmem:[#allocation5 + $0xf0] sm:$0xff] %v183
    %312 = vst [vmem:[#allocation5 + $0xf8] sm:$0xff] %v184
    %313 = vst [vmem:[#allocation5 + $0x100] sm:$0xff] %v185
    %314 = vst [vmem:[#allocation5 + $0x108] sm:$0xff] %v186
    %315 = vst [vmem:[#allocation5 + $0x110] sm:$0xff] %v187
    %316 = vst [vmem:[#allocation5 + $0x118] sm:$0xff] %v188
    %317 = vst [vmem:[#allocation5 + $0x120] sm:$0xff] %v189
    %318 = vst [vmem:[#allocation5 + $0x128] sm:$0xff] %v190
    %319 = vst [vmem:[#allocation5 + $0x130] sm:$0xff] %v191
    %320 = vst [vmem:[#allocation5 + $0x138] sm:$0xff] %v192
    %321 = vst [vmem:[#allocation5 + $0x140] sm:$0xff] %v193
    %322 = vst [vmem:[#allocation5 + $0x148] sm:$0xff] %v194
    %323 = vst [vmem:[#allocation5 + $0x150] sm:$0xff] %v195
    %324 = vst [vmem:[#allocation5 + $0x158] sm:$0xff] %v196
    %325 = vst [vmem:[#allocation5 + $0x160] sm:$0xff] %v197
    %326 = vst [vmem:[#allocation5 + $0x168] sm:$0xff] %v198
    %327 = vst [vmem:[#allocation5 + $0x170] sm:$0xff] %v199
    %328 = vst [vmem:[#allocation5 + $0x178] sm:$0xff] %v200
    %329 = vst [vmem:[#allocation5 + $0x180] sm:$0xff] %v201
    %330 = vst [vmem:[#allocation5 + $0x188] sm:$0xff] %v202
    %331 = vst [vmem:[#allocation5 + $0x190] sm:$0xff] %v203
    %332 = vst [vmem:[#allocation5 + $0x198] sm:$0xff] %v204
    %333 = vst [vmem:[#allocation5 + $0x1a0] sm:$0xff] %v205
    %334 = vst [vmem:[#allocation5 + $0x1a8] sm:$0xff] %v206
    %335 = vst [vmem:[#allocation5 + $0x1b0] sm:$0xff] %v207
    %336 = vst [vmem:[#allocation5 + $0x1b8] sm:$0xff] %v208
    %337 = vst [vmem:[#allocation5 + $0x1c0] sm:$0xff] %v209
    %338 = vst [vmem:[#allocation5 + $0x1c8] sm:$0xff] %v210
    %339 = vst [vmem:[#allocation5 + $0x1d0] sm:$0xff] %v211
    %340 = vst [vmem:[#allocation5 + $0x1d8] sm:$0xff] %v212
    %341 = vst [vmem:[#allocation5 + $0x1e0] sm:$0xff] %v213
    %342 = vst [vmem:[#allocation5 + $0x1e8] sm:$0xff] %v214
    %343 = vst [vmem:[#allocation5 + $0x1f0] sm:$0xff] %v215
    %344 = vst [vmem:[#allocation5 + $0x1f8] sm:$0xff] %v216
    %345 = vst [vmem:[#allocation5 + $0x200] sm:$0xff] %v217
    %346 = vst [vmem:[#allocation5 + $0x208] sm:$0xff] %v218
    %347 = vst [vmem:[#allocation5 + $0x210] sm:$0xff] %v219
    %348 = vst [vmem:[#allocation5 + $0x218] sm:$0xff] %v220
    %349 = vst [vmem:[#allocation5 + $0x220] sm:$0xff] %v221
    %350 = vst [vmem:[#allocation5 + $0x228] sm:$0xff] %v222
    %351 = vst [vmem:[#allocation5 + $0x230] sm:$0xff] %v223
    %352 = vst [vmem:[#allocation5 + $0x238] sm:$0xff] %v224
    %353 = vst [vmem:[#allocation5 + $0x240] sm:$0xff] %v225
    %354 = vst [vmem:[#allocation5 + $0x248] sm:$0xff] %v226
    %355 = vst [vmem:[#allocation5 + $0x250] sm:$0xff] %v227
    %356 = vst [vmem:[#allocation5 + $0x258] sm:$0xff] %v228
    %357 = vst [vmem:[#allocation5 + $0x260] sm:$0xff] %v229
    %358 = vst [vmem:[#allocation5 + $0x268] sm:$0xff] %v230
    %359 = vst [vmem:[#allocation5 + $0x270] sm:$0xff] %v231
    %360 = vst [vmem:[#allocation5 + $0x278] sm:$0xff] %v232
    %361 = vst [vmem:[#allocation5 + $0x280] sm:$0xff] %v233
    %362 = vst [vmem:[#allocation5 + $0x288] sm:$0xff] %v234
    %363 = vst [vmem:[#allocation5 + $0x290] sm:$0xff] %v235
    %364 = vst [vmem:[#allocation5 + $0x298] sm:$0xff] %v236
    %365 = vst [vmem:[#allocation5 + $0x2a0] sm:$0xff] %v237
    %366 = vst [vmem:[#allocation5 + $0x2a8] sm:$0xff] %v238
    %367 = vst [vmem:[#allocation5 + $0x2b0] sm:$0xff] %v239
    %368 = vst [vmem:[#allocation5 + $0x2b8] sm:$0xff] %v240
    %369 = vst [vmem:[#allocation5 + $0x2c0] sm:$0xff] %v241
    %370 = vst [vmem:[#allocation5 + $0x2c8] sm:$0xff] %v242
    %371 = vst [vmem:[#allocation5 + $0x2d0] sm:$0xff] %v243
    %372 = vst [vmem:[#allocation5 + $0x2d8] sm:$0xff] %v244
    %373 = vst [vmem:[#allocation5 + $0x2e0] sm:$0xff] %v245
    %374 = vst [vmem:[#allocation5 + $0x2e8] sm:$0xff] %v246
    %375 = vst [vmem:[#allocation5 + $0x2f0] sm:$0xff] %v247
    %376 = vst [vmem:[#allocation5 + $0x2f8] sm:$0xff] %v248
    %377 = vst [vmem:[#allocation5 + $0x300] sm:$0xff] %v249
    %378 = vst [vmem:[#allocation5 + $0x308] sm:$0xff] %v250
    %379 = vst [vmem:[#allocation5 + $0x310] sm:$0xff] %v251
    %380 = vst [vmem:[#allocation5 + $0x318] sm:$0xff] %v252
    %381 = vst [vmem:[#allocation5 + $0x320] sm:$0xff] %v253
    %382 = vst [vmem:[#allocation5 + $0x328] sm:$0xff] %v254
    %383 = vst [vmem:[#allocation5 + $0x330] sm:$0xff] %v255
    %384 = vst [vmem:[#allocation5 + $0x338] sm:$0xff] %v256
    %385 = vst [vmem:[#allocation5 + $0x340] sm:$0xff] %v257
    %386 = vst [vmem:[#allocation5 + $0x348] sm:$0xff] %v258
    %387 = vst [vmem:[#allocation5 + $0x350] sm:$0xff] %v259
    %388 = vst [vmem:[#allocation5 + $0x358] sm:$0xff] %v260
    %389 = vst [vmem:[#allocation5 + $0x360] sm:$0xff] %v261
    %390 = vst [vmem:[#allocation5 + $0x368] sm:$0xff] %v262
    %391 = vst [vmem:[#allocation5 + $0x370] sm:$0xff] %v263
    %392 = vst [vmem:[#allocation5 + $0x378] sm:$0xff] %v264
    %393 = vst [vmem:[#allocation5 + $0x380] sm:$0xff] %v265
    %394 = vst [vmem:[#allocation5 + $0x388] sm:$0xff] %v266
    %395 = vst [vmem:[#allocation5 + $0x390] sm:$0xff] %v267
    %396 = vst [vmem:[#allocation5 + $0x398] sm:$0xff] %v268
    %397 = vst [vmem:[#allocation5 + $0x3a0] sm:$0xff] %v269
    %398 = vst [vmem:[#allocation5 + $0x3a8] sm:$0xff] %v270
    %399 = vst [vmem:[#allocation5 + $0x3b0] sm:$0xff] %v271
    %400 = vst [vmem:[#allocation5 + $0x3b8] sm:$0xff] %v272
    %401 = vst [vmem:[#allocation5 + $0x3c0] sm:$0xff] %v273
    %402 = vst [vmem:[#allocation5 + $0x3c8] sm:$0xff] %v274
    %403 = vst [vmem:[#allocation5 + $0x3d0] sm:$0xff] %v275
    %404 = vst [vmem:[#allocation5 + $0x3d8] sm:$0xff] %v276
    %405 = vst [vmem:[#allocation5 + $0x3e0] sm:$0xff] %v277
    %406 = vst [vmem:[#allocation5 + $0x3e8] sm:$0xff] %v278
    %407 = vst [vmem:[#allocation5 + $0x3f0] sm:$0xff] %v279
    %408 = vst [vmem:[#allocation5 + $0x3f8] sm:$0xff] %v280
    // Predicated region
    $region10: #{tpu_custom_call.1} parent=1 // pred_check
      _
    $region11: #{tpu_custom_call.1} parent=1 // pred_check_branch
      %410 = sbr.rel (0) target = $region13
    $region12: #{tpu_custom_call.1} parent=1 // pred_region
      %412 = vsyncadd [#allocation4], 0
      %s413 = sshll.u32 [#allocation5], 4
      %s414 = int_to_ptr.vmem [resolvable:$true] %s413
      %s415 = sshll.u32 %s1, 4
      %s416 = int_to_ptr.hbm [resolvable:$true] %s415
      %421 = dma.vmem_to_hbm [thread:$0]  %s414, 16384, %s416, [#allocation4], 8192, 8192, 512
    $region13: #{tpu_custom_call.1} parent=1 // pred_fallthru
      _
    // Predicated region
    $region14: #{tpu_custom_call.1} parent=1 // pred_check
      _
    $region15: #{tpu_custom_call.1} parent=1 // pred_check_branch
      %423 = sbr.rel (0) target = $region17
    $region16: #{tpu_custom_call.1} parent=1 // pred_region
      %425 = dma.done [#allocation4], 16384
    $region17: #{tpu_custom_call.1} parent=1 // pred_fallthru
      _
    %426 = vsyncpa [#allocation3], 1
    %427 = vsyncpa [#allocation4], 1

</llo_original>
